<compile_context>
chip_gen: v7x
topology: tpu7x:2x2x1
jax: 0.10.0
libtpu: 0.0.40
codegen_flags: <defaults>
</compile_context>

<pallas_src>
import math
from functools import partial

import jax
import jax.numpy as jnp
import numpy as np
from jax.experimental import pallas as pl
from jax.experimental.pallas import tpu as pltpu

# ----- fixed architecture config (deterministic judge) -----
IN_NEUR = 6
DIV_COEF = 2.5
EPS = 1e-5                                 # BatchNorm1d default eps
NEG_SLOPE = 0.01                           # nn.LeakyReLU default

H1 = math.ceil(IN_NEUR / DIV_COEF)         # 3
H2 = math.ceil(H1 / DIV_COEF)              # 2

LANES = 128                                # samples per lane-group

# Packed flat-parameter layout (32 f32 scalars, SMEM-resident):
W1_OFF = 0                                 # (H1, IN_NEUR) row-major, BN1 folded
B1_OFF = W1_OFF + H1 * IN_NEUR             # 18
W2_OFF = B1_OFF + H1                       # 21, (H2, H1) row-major
B2_OFF = W2_OFF + H2 * H1                  # 27
W3_OFF = B2_OFF + H2                       # 29, (1, H2) with BN2 folded
B3_OFF = W3_OFF + H2                       # 31
N_PARAMS = B3_OFF + 1                      # 32


def _leaky(h):
    return jnp.where(h >= 0.0, h, NEG_SLOPE * h)


# --------------------------- Pallas kernel ---------------------------
def nnet_kernel(p_ref, x_ref, o_ref):
    """One batch tile.

    p_ref: f32[32] in SMEM (folded weights + biases, read as scalars).
    x_ref: f32[IN_NEUR, BR, 128] in VMEM (features x sublane-rows x lanes).
    o_ref: f32[BR, 128] lane-dense predictions.
    All compute is VPU broadcast-FMA + LeakyReLU selects; no MXU.
    """
    # Layer 1: Linear(6->3) with BN1 folded, then LeakyReLU (Dropout = id in eval).
    h1 = []
    for j in range(H1):
        acc = p_ref[W1_OFF + j * IN_NEUR] * x_ref[0]
        for k in range(1, IN_NEUR):
            acc = acc + p_ref[W1_OFF + j * IN_NEUR + k] * x_ref[k]
        h1.append(_leaky(acc + p_ref[B1_OFF + j]))

    # Layer 2: Linear(3->2) -> LeakyReLU (its BN2 is folded into the final Linear).
    h2 = []
    for j in range(H2):
        acc = p_ref[W2_OFF + j * H1] * h1[0]
        for k in range(1, H1):
            acc = acc + p_ref[W2_OFF + j * H1 + k] * h1[k]
        h2.append(_leaky(acc + p_ref[B2_OFF + j]))

    # Layer 3: BN2 + Linear(2->1), folded.
    out = p_ref[W3_OFF] * h2[0]
    for k in range(1, H2):
        out = out + p_ref[W3_OFF + k] * h2[k]
    o_ref[...] = out + p_ref[B3_OFF]


@partial(jax.jit, static_argnames=("block_rows",))
def nnet_forward(x, packed_params, block_rows=1024):
    """x: (B, IN_NEUR) f32 -> (B, 1) f32 predictions.

    block_rows = sublane-rows per grid step; each row holds 128 samples, so the
    default 1024 rows ≈ 131072 samples ≈ 3 MB of input per step.
    """
    b = x.shape[0]
    rows_needed = pl.cdiv(b, LANES)                  # 128-sample groups needed
    rows_rounded = pl.cdiv(rows_needed, 8) * 8       # sublane-aligned minimum
    br = min(block_rows, rows_rounded)
    br = max(8, (br // 8) * 8)                       # multiple of 8 sublanes
    rows_p = pl.cdiv(rows_needed, br) * br
    bp = rows_p * LANES
    steps = rows_p // br

    # Single fused pad + transpose + reshape copy: (B, 6) -> (6, rows_p, 128).
    # TODO(synk): accept x already in this layout from the producer to skip this copy.
    xp = jnp.pad(x.T, ((0, 0), (0, bp - b))).reshape(IN_NEUR, rows_p, LANES)

    out = pl.pallas_call(
        nnet_kernel,
        out_shape=jax.ShapeDtypeStruct((rows_p, LANES), jnp.float32),
        grid=(steps,),
        in_specs=[
            # whole param vector, SMEM-resident, copied once (not pipelined)
            pl.BlockSpec(memory_space=pltpu.MemorySpace.SMEM),
            # batch tile: features x (block_rows sublanes) x (128 lanes)
            pl.BlockSpec((IN_NEUR, br, LANES), lambda i: (0, i, 0)),
        ],
        out_specs=pl.BlockSpec((br, LANES), lambda i: (i, 0)),
        compiler_params=pltpu.CompilerParams(
            dimension_semantics=("parallel",)),      # shard batch across v7x cores
    )(packed_params, xp)

    return out.reshape(-1)[:b].reshape(b, 1)


# ----- deterministic parameter construction (matches nnet.init_weights) -----
def kaiming_normal(key, out_f, in_f):
    # nn.init.kaiming_normal_ default: fan_in, leaky_relu(a=0) -> std = sqrt(2/fan_in)
    std = math.sqrt(2.0 / in_f)
    return jax.random.normal(key, (out_f, in_f), jnp.float32) * std


def build_raw_params(key):
    ks = jax.random.split(key, 11)
    w1 = kaiming_normal(ks[0], H1, IN_NEUR)
    w2 = kaiming_normal(ks[1], H2, H1)
    w3 = kaiming_normal(ks[2], 1, H2)
    b1 = jnp.full((H1,), 1e-3, jnp.float32)
    b2 = jnp.full((H2,), 1e-3, jnp.float32)
    b3 = jnp.full((1,), 1e-3, jnp.float32)
    # Eval-mode BatchNorm params/buffers (non-trivial values to exercise the folding;
    # a freshly built nnet would have gamma=1, beta=0, mean=0, var=1).
    g1 = 1.0 + 0.1 * jax.random.normal(ks[3], (H1,), jnp.float32)
    be1 = 0.1 * jax.random.normal(ks[4], (H1,), jnp.float32)
    m1 = 0.1 * jax.random.normal(ks[5], (H1,), jnp.float32)
    v1 = jax.random.uniform(ks[6], (H1,), jnp.float32, 0.5, 1.5)
    g2 = 1.0 + 0.1 * jax.random.normal(ks[7], (H2,), jnp.float32)
    be2 = 0.1 * jax.random.normal(ks[8], (H2,), jnp.float32)
    m2 = 0.1 * jax.random.normal(ks[9], (H2,), jnp.float32)
    v2 = jax.random.uniform(ks[10], (H2,), jnp.float32, 0.5, 1.5)
    return dict(w1=w1, b1=b1, w2=w2, b2=b2, w3=w3, b3=b3,
                g1=g1, be1=be1, m1=m1, v1=v1, g2=g2, be2=be2, m2=m2, v2=v2)


def fold_and_pack(r):
    """Fold BN1 into Linear1 and BN2 into Linear3; pack into one flat f32[32]."""
    s1 = r["g1"] / jnp.sqrt(r["v1"] + EPS)                 # BN1 per-channel scale
    w1f = r["w1"] * s1[:, None]                            # (H1, IN): scale output rows
    b1f = (r["b1"] - r["m1"]) * s1 + r["be1"]

    s2 = r["g2"] / jnp.sqrt(r["v2"] + EPS)                 # BN2 per-channel scale
    w3f = r["w3"] * s2[None, :]                            # (1, H2): scale input cols
    b3f = r["b3"] + jnp.sum(r["w3"] * (r["be2"] - r["m2"] * s2)[None, :], axis=1)

    packed = jnp.concatenate([
        w1f.reshape(-1),        # 18
        b1f,                    # 3
        r["w2"].reshape(-1),    # 6
        r["b2"],                # 2
        w3f.reshape(-1),        # 2
        b3f,                    # 1
    ]).astype(jnp.float32)
    assert packed.shape == (N_PARAMS,)
    return packed


def ref_forward(x, r):
    """Pure-JAX reference of the PyTorch eval-mode forward (no folding)."""
    prec = jax.lax.Precision.HIGHEST
    h = jnp.dot(x, r["w1"].T, precision=prec) + r["b1"]
    h = (h - r["m1"]) / jnp.sqrt(r["v1"] + EPS) * r["g1"] + r["be1"]
    h = _leaky(h)
    h = jnp.dot(h, r["w2"].T, precision=prec) + r["b2"]
    h = _leaky(h)
    h = (h - r["m2"]) / jnp.sqrt(r["v2"] + EPS) * r["g2"] + r["be2"]
    return jnp.dot(h, r["w3"].T, precision=prec) + r["b3"]


if __name__ == "__main__":
    key = jax.random.PRNGKey(0)
    kx, kp = jax.random.split(key)

    BATCH = 2048          # small demo batch; block_rows=8 -> 1024 samples/step, 2 grid steps
    x = jax.random.normal(kx, (BATCH, IN_NEUR), jnp.float32)

    raw = build_raw_params(kp)
    packed = fold_and_pack(raw)

    out = nnet_forward(x, packed, block_rows=8)
    out = jax.block_until_ready(out)

    ref = ref_forward(x, raw)
    np.testing.assert_allclose(np.asarray(out), np.asarray(ref),
                               rtol=1e-5, atol=1e-5)
    print("KERNEL_OK")
</pallas_src>

<mosaic_0001>
module attributes {stable_mosaic.version = 11 : i64} {
  func.func @nnet_kernel(%arg0: i32, %arg1: memref<32xf32, #tpu.memory_space<smem>>, %arg2: memref<6x8x128xf32, #tpu.memory_space<vmem>>, %arg3: memref<8x128xf32, #tpu.memory_space<vmem>>) attributes {dimension_semantics = [#tpu.dimension_semantics<parallel>], iteration_bounds = array<i64: 2>, scalar_prefetch = 0 : i64, scratch_operands = 0 : i64, tpu.core_type = #tpu.core_type<tc>, window_params = [{transform_indices = @transform_0, window_bounds = array<i64: 32>}, {transform_indices = @transform_1, window_bounds = array<i64: 6, 8, 128>}, {transform_indices = @transform_2, window_bounds = array<i64: 8, 128>}]} {
    %c0 = arith.constant 0 : index
    %0 = memref.load %arg1[%c0] : memref<32xf32, #tpu.memory_space<smem>>
    %c0_0 = arith.constant 0 : index
    %c0_1 = arith.constant 0 : index
    %c0_2 = arith.constant 0 : index
    %1 = vector.load %arg2[%c0_0, %c0_1, %c0_2] : memref<6x8x128xf32, #tpu.memory_space<vmem>>, vector<1x8x128xf32>
    %2 = vector.shape_cast %1 : vector<1x8x128xf32> to vector<8x128xf32>
    %3 = vector.broadcast %0 : f32 to vector<8x128xf32>
    %4 = arith.mulf %3, %2 : vector<8x128xf32>
    %c1 = arith.constant 1 : index
    %5 = memref.load %arg1[%c1] : memref<32xf32, #tpu.memory_space<smem>>
    %c1_3 = arith.constant 1 : index
    %c0_4 = arith.constant 0 : index
    %c0_5 = arith.constant 0 : index
    %6 = vector.load %arg2[%c1_3, %c0_4, %c0_5] : memref<6x8x128xf32, #tpu.memory_space<vmem>>, vector<1x8x128xf32>
    %7 = vector.shape_cast %6 : vector<1x8x128xf32> to vector<8x128xf32>
    %8 = vector.broadcast %5 : f32 to vector<8x128xf32>
    %9 = arith.mulf %8, %7 : vector<8x128xf32>
    %10 = arith.addf %4, %9 : vector<8x128xf32>
    %c2 = arith.constant 2 : index
    %11 = memref.load %arg1[%c2] : memref<32xf32, #tpu.memory_space<smem>>
    %c2_6 = arith.constant 2 : index
    %c0_7 = arith.constant 0 : index
    %c0_8 = arith.constant 0 : index
    %12 = vector.load %arg2[%c2_6, %c0_7, %c0_8] : memref<6x8x128xf32, #tpu.memory_space<vmem>>, vector<1x8x128xf32>
    %13 = vector.shape_cast %12 : vector<1x8x128xf32> to vector<8x128xf32>
    %14 = vector.broadcast %11 : f32 to vector<8x128xf32>
    %15 = arith.mulf %14, %13 : vector<8x128xf32>
    %16 = arith.addf %10, %15 : vector<8x128xf32>
    %c3 = arith.constant 3 : index
    %17 = memref.load %arg1[%c3] : memref<32xf32, #tpu.memory_space<smem>>
    %c3_9 = arith.constant 3 : index
    %c0_10 = arith.constant 0 : index
    %c0_11 = arith.constant 0 : index
    %18 = vector.load %arg2[%c3_9, %c0_10, %c0_11] : memref<6x8x128xf32, #tpu.memory_space<vmem>>, vector<1x8x128xf32>
    %19 = vector.shape_cast %18 : vector<1x8x128xf32> to vector<8x128xf32>
    %20 = vector.broadcast %17 : f32 to vector<8x128xf32>
    %21 = arith.mulf %20, %19 : vector<8x128xf32>
    %22 = arith.addf %16, %21 : vector<8x128xf32>
    %c4 = arith.constant 4 : index
    %23 = memref.load %arg1[%c4] : memref<32xf32, #tpu.memory_space<smem>>
    %c4_12 = arith.constant 4 : index
    %c0_13 = arith.constant 0 : index
    %c0_14 = arith.constant 0 : index
    %24 = vector.load %arg2[%c4_12, %c0_13, %c0_14] : memref<6x8x128xf32, #tpu.memory_space<vmem>>, vector<1x8x128xf32>
    %25 = vector.shape_cast %24 : vector<1x8x128xf32> to vector<8x128xf32>
    %26 = vector.broadcast %23 : f32 to vector<8x128xf32>
    %27 = arith.mulf %26, %25 : vector<8x128xf32>
    %28 = arith.addf %22, %27 : vector<8x128xf32>
    %c5 = arith.constant 5 : index
    %29 = memref.load %arg1[%c5] : memref<32xf32, #tpu.memory_space<smem>>
    %c5_15 = arith.constant 5 : index
    %c0_16 = arith.constant 0 : index
    %c0_17 = arith.constant 0 : index
    %30 = vector.load %arg2[%c5_15, %c0_16, %c0_17] : memref<6x8x128xf32, #tpu.memory_space<vmem>>, vector<1x8x128xf32>
    %31 = vector.shape_cast %30 : vector<1x8x128xf32> to vector<8x128xf32>
    %32 = vector.broadcast %29 : f32 to vector<8x128xf32>
    %33 = arith.mulf %32, %31 : vector<8x128xf32>
    %34 = arith.addf %28, %33 : vector<8x128xf32>
    %c18 = arith.constant 18 : index
    %35 = memref.load %arg1[%c18] : memref<32xf32, #tpu.memory_space<smem>>
    %36 = vector.broadcast %35 : f32 to vector<8x128xf32>
    %37 = arith.addf %34, %36 : vector<8x128xf32>
    %cst = arith.constant 0.000000e+00 : f32
    %38 = vector.broadcast %cst : f32 to vector<8x128xf32>
    %39 = arith.cmpf oge, %37, %38 : vector<8x128xf32>
    %cst_18 = arith.constant 0.00999999977 : f32
    %40 = vector.broadcast %cst_18 : f32 to vector<8x128xf32>
    %41 = arith.mulf %40, %37 : vector<8x128xf32>
    %42 = arith.select %39, %37, %41 : vector<8x128xi1>, vector<8x128xf32>
    %c6 = arith.constant 6 : index
    %43 = memref.load %arg1[%c6] : memref<32xf32, #tpu.memory_space<smem>>
    %c0_19 = arith.constant 0 : index
    %c0_20 = arith.constant 0 : index
    %c0_21 = arith.constant 0 : index
    %44 = vector.load %arg2[%c0_19, %c0_20, %c0_21] : memref<6x8x128xf32, #tpu.memory_space<vmem>>, vector<1x8x128xf32>
    %45 = vector.shape_cast %44 : vector<1x8x128xf32> to vector<8x128xf32>
    %46 = vector.broadcast %43 : f32 to vector<8x128xf32>
    %47 = arith.mulf %46, %45 : vector<8x128xf32>
    %c7 = arith.constant 7 : index
    %48 = memref.load %arg1[%c7] : memref<32xf32, #tpu.memory_space<smem>>
    %c1_22 = arith.constant 1 : index
    %c0_23 = arith.constant 0 : index
    %c0_24 = arith.constant 0 : index
    %49 = vector.load %arg2[%c1_22, %c0_23, %c0_24] : memref<6x8x128xf32, #tpu.memory_space<vmem>>, vector<1x8x128xf32>
    %50 = vector.shape_cast %49 : vector<1x8x128xf32> to vector<8x128xf32>
    %51 = vector.broadcast %48 : f32 to vector<8x128xf32>
    %52 = arith.mulf %51, %50 : vector<8x128xf32>
    %53 = arith.addf %47, %52 : vector<8x128xf32>
    %c8 = arith.constant 8 : index
    %54 = memref.load %arg1[%c8] : memref<32xf32, #tpu.memory_space<smem>>
    %c2_25 = arith.constant 2 : index
    %c0_26 = arith.constant 0 : index
    %c0_27 = arith.constant 0 : index
    %55 = vector.load %arg2[%c2_25, %c0_26, %c0_27] : memref<6x8x128xf32, #tpu.memory_space<vmem>>, vector<1x8x128xf32>
    %56 = vector.shape_cast %55 : vector<1x8x128xf32> to vector<8x128xf32>
    %57 = vector.broadcast %54 : f32 to vector<8x128xf32>
    %58 = arith.mulf %57, %56 : vector<8x128xf32>
    %59 = arith.addf %53, %58 : vector<8x128xf32>
    %c9 = arith.constant 9 : index
    %60 = memref.load %arg1[%c9] : memref<32xf32, #tpu.memory_space<smem>>
    %c3_28 = arith.constant 3 : index
    %c0_29 = arith.constant 0 : index
    %c0_30 = arith.constant 0 : index
    %61 = vector.load %arg2[%c3_28, %c0_29, %c0_30] : memref<6x8x128xf32, #tpu.memory_space<vmem>>, vector<1x8x128xf32>
    %62 = vector.shape_cast %61 : vector<1x8x128xf32> to vector<8x128xf32>
    %63 = vector.broadcast %60 : f32 to vector<8x128xf32>
    %64 = arith.mulf %63, %62 : vector<8x128xf32>
    %65 = arith.addf %59, %64 : vector<8x128xf32>
    %c10 = arith.constant 10 : index
    %66 = memref.load %arg1[%c10] : memref<32xf32, #tpu.memory_space<smem>>
    %c4_31 = arith.constant 4 : index
    %c0_32 = arith.constant 0 : index
    %c0_33 = arith.constant 0 : index
    %67 = vector.load %arg2[%c4_31, %c0_32, %c0_33] : memref<6x8x128xf32, #tpu.memory_space<vmem>>, vector<1x8x128xf32>
    %68 = vector.shape_cast %67 : vector<1x8x128xf32> to vector<8x128xf32>
    %69 = vector.broadcast %66 : f32 to vector<8x128xf32>
    %70 = arith.mulf %69, %68 : vector<8x128xf32>
    %71 = arith.addf %65, %70 : vector<8x128xf32>
    %c11 = arith.constant 11 : index
    %72 = memref.load %arg1[%c11] : memref<32xf32, #tpu.memory_space<smem>>
    %c5_34 = arith.constant 5 : index
    %c0_35 = arith.constant 0 : index
    %c0_36 = arith.constant 0 : index
    %73 = vector.load %arg2[%c5_34, %c0_35, %c0_36] : memref<6x8x128xf32, #tpu.memory_space<vmem>>, vector<1x8x128xf32>
    %74 = vector.shape_cast %73 : vector<1x8x128xf32> to vector<8x128xf32>
    %75 = vector.broadcast %72 : f32 to vector<8x128xf32>
    %76 = arith.mulf %75, %74 : vector<8x128xf32>
    %77 = arith.addf %71, %76 : vector<8x128xf32>
    %c19 = arith.constant 19 : index
    %78 = memref.load %arg1[%c19] : memref<32xf32, #tpu.memory_space<smem>>
    %79 = vector.broadcast %78 : f32 to vector<8x128xf32>
    %80 = arith.addf %77, %79 : vector<8x128xf32>
    %cst_37 = arith.constant 0.000000e+00 : f32
    %81 = vector.broadcast %cst_37 : f32 to vector<8x128xf32>
    %82 = arith.cmpf oge, %80, %81 : vector<8x128xf32>
    %cst_38 = arith.constant 0.00999999977 : f32
    %83 = vector.broadcast %cst_38 : f32 to vector<8x128xf32>
    %84 = arith.mulf %83, %80 : vector<8x128xf32>
    %85 = arith.select %82, %80, %84 : vector<8x128xi1>, vector<8x128xf32>
    %c12 = arith.constant 12 : index
    %86 = memref.load %arg1[%c12] : memref<32xf32, #tpu.memory_space<smem>>
    %c0_39 = arith.constant 0 : index
    %c0_40 = arith.constant 0 : index
    %c0_41 = arith.constant 0 : index
    %87 = vector.load %arg2[%c0_39, %c0_40, %c0_41] : memref<6x8x128xf32, #tpu.memory_space<vmem>>, vector<1x8x128xf32>
    %88 = vector.shape_cast %87 : vector<1x8x128xf32> to vector<8x128xf32>
    %89 = vector.broadcast %86 : f32 to vector<8x128xf32>
    %90 = arith.mulf %89, %88 : vector<8x128xf32>
    %c13 = arith.constant 13 : index
    %91 = memref.load %arg1[%c13] : memref<32xf32, #tpu.memory_space<smem>>
    %c1_42 = arith.constant 1 : index
    %c0_43 = arith.constant 0 : index
    %c0_44 = arith.constant 0 : index
    %92 = vector.load %arg2[%c1_42, %c0_43, %c0_44] : memref<6x8x128xf32, #tpu.memory_space<vmem>>, vector<1x8x128xf32>
    %93 = vector.shape_cast %92 : vector<1x8x128xf32> to vector<8x128xf32>
    %94 = vector.broadcast %91 : f32 to vector<8x128xf32>
    %95 = arith.mulf %94, %93 : vector<8x128xf32>
    %96 = arith.addf %90, %95 : vector<8x128xf32>
    %c14 = arith.constant 14 : index
    %97 = memref.load %arg1[%c14] : memref<32xf32, #tpu.memory_space<smem>>
    %c2_45 = arith.constant 2 : index
    %c0_46 = arith.constant 0 : index
    %c0_47 = arith.constant 0 : index
    %98 = vector.load %arg2[%c2_45, %c0_46, %c0_47] : memref<6x8x128xf32, #tpu.memory_space<vmem>>, vector<1x8x128xf32>
    %99 = vector.shape_cast %98 : vector<1x8x128xf32> to vector<8x128xf32>
    %100 = vector.broadcast %97 : f32 to vector<8x128xf32>
    %101 = arith.mulf %100, %99 : vector<8x128xf32>
    %102 = arith.addf %96, %101 : vector<8x128xf32>
    %c15 = arith.constant 15 : index
    %103 = memref.load %arg1[%c15] : memref<32xf32, #tpu.memory_space<smem>>
    %c3_48 = arith.constant 3 : index
    %c0_49 = arith.constant 0 : index
    %c0_50 = arith.constant 0 : index
    %104 = vector.load %arg2[%c3_48, %c0_49, %c0_50] : memref<6x8x128xf32, #tpu.memory_space<vmem>>, vector<1x8x128xf32>
    %105 = vector.shape_cast %104 : vector<1x8x128xf32> to vector<8x128xf32>
    %106 = vector.broadcast %103 : f32 to vector<8x128xf32>
    %107 = arith.mulf %106, %105 : vector<8x128xf32>
    %108 = arith.addf %102, %107 : vector<8x128xf32>
    %c16 = arith.constant 16 : index
    %109 = memref.load %arg1[%c16] : memref<32xf32, #tpu.memory_space<smem>>
    %c4_51 = arith.constant 4 : index
    %c0_52 = arith.constant 0 : index
    %c0_53 = arith.constant 0 : index
    %110 = vector.load %arg2[%c4_51, %c0_52, %c0_53] : memref<6x8x128xf32, #tpu.memory_space<vmem>>, vector<1x8x128xf32>
    %111 = vector.shape_cast %110 : vector<1x8x128xf32> to vector<8x128xf32>
    %112 = vector.broadcast %109 : f32 to vector<8x128xf32>
    %113 = arith.mulf %112, %111 : vector<8x128xf32>
    %114 = arith.addf %108, %113 : vector<8x128xf32>
    %c17 = arith.constant 17 : index
    %115 = memref.load %arg1[%c17] : memref<32xf32, #tpu.memory_space<smem>>
    %c5_54 = arith.constant 5 : index
    %c0_55 = arith.constant 0 : index
    %c0_56 = arith.constant 0 : index
    %116 = vector.load %arg2[%c5_54, %c0_55, %c0_56] : memref<6x8x128xf32, #tpu.memory_space<vmem>>, vector<1x8x128xf32>
    %117 = vector.shape_cast %116 : vector<1x8x128xf32> to vector<8x128xf32>
    %118 = vector.broadcast %115 : f32 to vector<8x128xf32>
    %119 = arith.mulf %118, %117 : vector<8x128xf32>
    %120 = arith.addf %114, %119 : vector<8x128xf32>
    %c20 = arith.constant 20 : index
    %121 = memref.load %arg1[%c20] : memref<32xf32, #tpu.memory_space<smem>>
    %122 = vector.broadcast %121 : f32 to vector<8x128xf32>
    %123 = arith.addf %120, %122 : vector<8x128xf32>
    %cst_57 = arith.constant 0.000000e+00 : f32
    %124 = vector.broadcast %cst_57 : f32 to vector<8x128xf32>
    %125 = arith.cmpf oge, %123, %124 : vector<8x128xf32>
    %cst_58 = arith.constant 0.00999999977 : f32
    %126 = vector.broadcast %cst_58 : f32 to vector<8x128xf32>
    %127 = arith.mulf %126, %123 : vector<8x128xf32>
    %128 = arith.select %125, %123, %127 : vector<8x128xi1>, vector<8x128xf32>
    %c21 = arith.constant 21 : index
    %129 = memref.load %arg1[%c21] : memref<32xf32, #tpu.memory_space<smem>>
    %130 = vector.broadcast %129 : f32 to vector<8x128xf32>
    %131 = arith.mulf %130, %42 : vector<8x128xf32>
    %c22 = arith.constant 22 : index
    %132 = memref.load %arg1[%c22] : memref<32xf32, #tpu.memory_space<smem>>
    %133 = vector.broadcast %132 : f32 to vector<8x128xf32>
    %134 = arith.mulf %133, %85 : vector<8x128xf32>
    %135 = arith.addf %131, %134 : vector<8x128xf32>
    %c23 = arith.constant 23 : index
    %136 = memref.load %arg1[%c23] : memref<32xf32, #tpu.memory_space<smem>>
    %137 = vector.broadcast %136 : f32 to vector<8x128xf32>
    %138 = arith.mulf %137, %128 : vector<8x128xf32>
    %139 = arith.addf %135, %138 : vector<8x128xf32>
    %c27 = arith.constant 27 : index
    %140 = memref.load %arg1[%c27] : memref<32xf32, #tpu.memory_space<smem>>
    %141 = vector.broadcast %140 : f32 to vector<8x128xf32>
    %142 = arith.addf %139, %141 : vector<8x128xf32>
    %cst_59 = arith.constant 0.000000e+00 : f32
    %143 = vector.broadcast %cst_59 : f32 to vector<8x128xf32>
    %144 = arith.cmpf oge, %142, %143 : vector<8x128xf32>
    %cst_60 = arith.constant 0.00999999977 : f32
    %145 = vector.broadcast %cst_60 : f32 to vector<8x128xf32>
    %146 = arith.mulf %145, %142 : vector<8x128xf32>
    %147 = arith.select %144, %142, %146 : vector<8x128xi1>, vector<8x128xf32>
    %c24 = arith.constant 24 : index
    %148 = memref.load %arg1[%c24] : memref<32xf32, #tpu.memory_space<smem>>
    %149 = vector.broadcast %148 : f32 to vector<8x128xf32>
    %150 = arith.mulf %149, %42 : vector<8x128xf32>
    %c25 = arith.constant 25 : index
    %151 = memref.load %arg1[%c25] : memref<32xf32, #tpu.memory_space<smem>>
    %152 = vector.broadcast %151 : f32 to vector<8x128xf32>
    %153 = arith.mulf %152, %85 : vector<8x128xf32>
    %154 = arith.addf %150, %153 : vector<8x128xf32>
    %c26 = arith.constant 26 : index
    %155 = memref.load %arg1[%c26] : memref<32xf32, #tpu.memory_space<smem>>
    %156 = vector.broadcast %155 : f32 to vector<8x128xf32>
    %157 = arith.mulf %156, %128 : vector<8x128xf32>
    %158 = arith.addf %154, %157 : vector<8x128xf32>
    %c28 = arith.constant 28 : index
    %159 = memref.load %arg1[%c28] : memref<32xf32, #tpu.memory_space<smem>>
    %160 = vector.broadcast %159 : f32 to vector<8x128xf32>
    %161 = arith.addf %158, %160 : vector<8x128xf32>
    %cst_61 = arith.constant 0.000000e+00 : f32
    %162 = vector.broadcast %cst_61 : f32 to vector<8x128xf32>
    %163 = arith.cmpf oge, %161, %162 : vector<8x128xf32>
    %cst_62 = arith.constant 0.00999999977 : f32
    %164 = vector.broadcast %cst_62 : f32 to vector<8x128xf32>
    %165 = arith.mulf %164, %161 : vector<8x128xf32>
    %166 = arith.select %163, %161, %165 : vector<8x128xi1>, vector<8x128xf32>
    %c29 = arith.constant 29 : index
    %167 = memref.load %arg1[%c29] : memref<32xf32, #tpu.memory_space<smem>>
    %168 = vector.broadcast %167 : f32 to vector<8x128xf32>
    %169 = arith.mulf %168, %147 : vector<8x128xf32>
    %c30 = arith.constant 30 : index
    %170 = memref.load %arg1[%c30] : memref<32xf32, #tpu.memory_space<smem>>
    %171 = vector.broadcast %170 : f32 to vector<8x128xf32>
    %172 = arith.mulf %171, %166 : vector<8x128xf32>
    %173 = arith.addf %169, %172 : vector<8x128xf32>
    %c31 = arith.constant 31 : index
    %174 = memref.load %arg1[%c31] : memref<32xf32, #tpu.memory_space<smem>>
    %175 = vector.broadcast %174 : f32 to vector<8x128xf32>
    %176 = arith.addf %173, %175 : vector<8x128xf32>
    %c0_63 = arith.constant 0 : index
    %c0_64 = arith.constant 0 : index
    %177 = vector.load %arg3[%c0_63, %c0_64] : memref<8x128xf32, #tpu.memory_space<vmem>>, vector<8x128xf32>
    tpu.vector_store %arg3[%c0_63, %c0_64], %176 {strides = array<i32>} : memref<8x128xf32, #tpu.memory_space<vmem>>, vector<8x128xf32>,
    return
  }
  func.func @transform_0(%arg0: i32) -> i32 {
    %c0_i32 = arith.constant 0 : i32
    %c0_i32_0 = arith.constant 0 : i32
    return %c0_i32 : i32
  }
  func.func @transform_1(%arg0: i32) -> (i32, i32, i32) {
    %c0_i32 = arith.constant 0 : i32
    %c0_i32_0 = arith.constant 0 : i32
    %c0_i32_1 = arith.constant 0 : i32
    return %c0_i32, %arg0, %c0_i32_0 : i32, i32, i32
  }
  func.func @transform_2(%arg0: i32) -> (i32, i32) {
    %c0_i32 = arith.constant 0 : i32
    %c0_i32_0 = arith.constant 0 : i32
    return %arg0, %c0_i32 : i32, i32
  }
}

</mosaic_0001>

<llo_original>
// kernel: nnet_forward.1
$region0: #{nnet_forward.1}
  #allocation0 [shape = 'u32[]', space=smem, size = 0x4, offset = 0x4, fixed_abs, tag = 'smem constant byte address 0x4 - core index']
  #allocation1 [shape = 'u32[144,128]{1,0:T(1,128)}', space=vmem, size = 0x12000, scoped, tag = 'internal scratch']
  %s0 = inlined_call_operand.vmem [shape: f32[32], index: 0, kind: input, shape index: {}]
  %s1 = inlined_call_operand.vmem [shape: f32[6,16,128], index: 1, kind: input, shape index: {}]
  %s2 = inlined_call_operand.hbm [shape: f32[16,128], index: 2, kind: output, shape index: {}]
  %s3 = sld [smem:[#allocation0]]
  $region83: #{nnet_forward.1} parent=0
    _
  %s5 = ssub.s32 1, %s3
  %s6 = scalar_select 0, %s5, %s3
  $region1: #{nnet_forward.1} parent=0
    #allocation2 [shape = 'u8[512]{0}', space=smem, size = 0x200, scoped, tag = 'input window, operand 0, single buffered']
    #allocation3 [shape = 's32[2]{0}', space=sflag, size = 0x8, scoped, tag = 'scoped memory for nnet_forward.1']
    #allocation4 [shape = 's32[2]{0}', space=sflag, size = 0x8, scoped, tag = 'scoped memory for nnet_forward.1']
    #allocation5 [shape = 'u8[49152]{0}', space=vmem, size = 0xc000, scoped, tag = 'input window, operand 1']
    #allocation6 [shape = 'u8[8192]{0}', space=vmem, size = 0x2000, scoped, tag = 'output window, operand 0']
    %7 = vsyncpa [#allocation4], 0
    %8 = vsyncpa [#allocation3], 0
    %s9 = scalar_lea.sflag [#allocation3], 1
    %10 = vsyncpa %s9, 0
    loop: start=0, step=1, limit=4
    $region2: #{nnet_forward.1} parent=1 // loop_pre_header
      _
    $region3: #{nnet_forward.1} parent=1 // loop_header
      %s12 = sphi 0, %s16
      %p13 = scmp.ge.s32.totalorder %s12, 4
      %s20 = sphi 0, %s20
      %s22 = sphi 0, %s20
      %s23 = sphi 0, %s22
      %s37 = sphi 0, %s23
      %s43 = sphi 0, %s45
      %s46 = sphi 0, %s43
      %s47 = sphi 0, %s46
      %s63 = sphi 0, %s47
      %s69 = sphi 0, %s71
      %s72 = sphi 0, %s69
      %s73 = sphi 0, %s72
      %s89 = sphi 0, %s73
    $region4: #{nnet_forward.1} parent=1 // loop_header_branch
      %15 = sbr.rel (%p13) target = $region8
    $region5: #{nnet_forward.1} parent=1 // loop_body
      %s17 = ssub.s32 %s12, 1
      %s18 = ssub.s32 %s12, 2
      %s19 = sadd.s32 %s12, 1
      %s21 = sadd.s32 %s20, 1
      %p24 = scmp.eq.s32.totalorder %s12, 1
      %p25 = scmp.ne.s32.totalorder %s20, %s22
      %p26 = scmp.eq.s32.totalorder %s12, 0
      %p27 = por %p25, %p26
      %p28 = scmp.ne.s32.totalorder %s20, %s22
      %p29 = scmp.eq.s32.totalorder %s17, 1
      %p30 = por %p28, %p29
      %p31 = scmp.ne.s32.totalorder %s22, %s23
      %p32 = scmp.eq.s32.totalorder %s17, 0
      %p33 = por %p31, %p32
      %p34 = scmp.ne.s32.totalorder %s22, %s23
      %p35 = scmp.eq.s32.totalorder %s18, 1
      %p36 = por %p34, %p35
      %p38 = scmp.ne.s32.totalorder %s23, %s37
      %p39 = scmp.eq.s32.totalorder %s18, 0
      %p40 = por %p38, %p39
      %s41 = ssub.s32 %s12, %s19
      %p42 = scmp.eq.s32.totalorder %s41, 0
      %s44 = sadd.s32 %s43, 1
      %s45 = scalar_select %p42, %s43, %s44
      %p48 = pneg %p42
      %p49 = scmp.eq.s32.totalorder %s12, 1
      %p50 = por %p48, %p49
      %p51 = scmp.ne.s32.totalorder %s43, %s46
      %p52 = scmp.eq.s32.totalorder %s12, 0
      %p53 = por %p51, %p52
      %p54 = scmp.ne.s32.totalorder %s43, %s46
      %p55 = scmp.eq.s32.totalorder %s17, 1
      %p56 = por %p54, %p55
      %p57 = scmp.ne.s32.totalorder %s46, %s47
      %p58 = scmp.eq.s32.totalorder %s17, 0
      %p59 = por %p57, %p58
      %p60 = scmp.ne.s32.totalorder %s46, %s47
      %p61 = scmp.eq.s32.totalorder %s18, 1
      %p62 = por %p60, %p61
      %p64 = scmp.ne.s32.totalorder %s47, %s63
      %p65 = scmp.eq.s32.totalorder %s18, 0
      %p66 = por %p64, %p65
      %s67 = ssub.s32 %s12, %s19
      %p68 = scmp.eq.s32.totalorder %s67, 0
      %s70 = sadd.s32 %s69, 1
      %s71 = scalar_select %p68, %s69, %s70
      %p74 = pneg %p68
      %p75 = scmp.eq.s32.totalorder %s12, 1
      %p76 = por %p74, %p75
      %p77 = scmp.ne.s32.totalorder %s69, %s72
      %p78 = scmp.eq.s32.totalorder %s12, 0
      %p79 = por %p77, %p78
      %p80 = scmp.ne.s32.totalorder %s69, %s72
      %p81 = scmp.eq.s32.totalorder %s17, 1
      %p82 = por %p80, %p81
      %p83 = scmp.ne.s32.totalorder %s72, %s73
      %p84 = scmp.eq.s32.totalorder %s17, 0
      %p85 = por %p83, %p84
      %p86 = scmp.ne.s32.totalorder %s72, %s73
      %p87 = scmp.eq.s32.totalorder %s18, 1
      %p88 = por %p86, %p87
      %p90 = scmp.ne.s32.totalorder %s73, %s89
      %p91 = scmp.eq.s32.totalorder %s18, 0
      %p92 = por %p90, %p91
      %p93 = scmp.le.s32.totalorder 1, %s12
      %p94 = scmp.lt.s32.totalorder %s12, 3
      %p95 = pnand %p93, %p94
      %p96 = pneg %p95
      // Predicated region
      $region9: #{nnet_forward.1} parent=5 // pred_check
        _
      $region10: #{nnet_forward.1} parent=5 // pred_check_branch
        %98 = sbr.rel (%p95) target = $region12
      $region11: #{nnet_forward.1} parent=5 // pred_region
        %s99 = ssub.s32 %s12, 1
        // Predicated region
        $region13: #{nnet_forward.1} parent=11 // pred_check
          %p100 = pneg %p33
        $region14: #{nnet_forward.1} parent=11 // pred_check_branch
          %102 = sbr.rel (%p100) target = $region16
        $region15: #{nnet_forward.1} parent=11 // pred_region
          %s104 = ssub.s32 16, 16
          %105 = vsyncadd [#allocation4], %s104
          %s107 = sshll.u32 %s0, 4
          %s108 = int_to_ptr.vmem [resolvable:$true] %s107
          %110 = dma.vmem_to_smem %s108, 16, [#allocation2], [#allocation4]
        $region16: #{nnet_forward.1} parent=11 // pred_fallthru
          _
      $region12: #{nnet_forward.1} parent=5 // pred_fallthru
        _
      %p111 = scmp.lt.s32.totalorder %s12, 2
      // Predicated region
      $region17: #{nnet_forward.1} parent=5 // pred_check
        %p112 = pneg %p111
      $region18: #{nnet_forward.1} parent=5 // pred_check_branch
        %114 = sbr.rel (%p112) target = $region20
      $region19: #{nnet_forward.1} parent=5 // pred_region
        // Predicated region
        $region21: #{nnet_forward.1} parent=19 // pred_check
          %p115 = pneg %p53
        $region22: #{nnet_forward.1} parent=19 // pred_check_branch
          %117 = sbr.rel (%p115) target = $region24
        $region23: #{nnet_forward.1} parent=19 // pred_region
          %s118 = sand.u32 %s43, 1
          %s119 = sand.u32 %s43, 1
          %s120 = smul.addr %s119, 48
          %s121 = scalar_lea.vmem [#allocation5], %s120
          %s122 = smul.addr %s12, 8
          %s123 = scalar_lea.vmem %s1, %s122
          // Predicated region
          $region25: #{nnet_forward.1} parent=23 // pred_check
            _
          $region26: #{nnet_forward.1} parent=23 // pred_check_branch
            %125 = sbr.rel (0) target = $region28
          $region27: #{nnet_forward.1} parent=23 // pred_region
            // Predicated region
            $region29: #{nnet_forward.1} parent=27 // pred_check
              _
            $region30: #{nnet_forward.1} parent=27 // pred_check_branch
              %127 = sbr.rel (0) target = $region32
            $region31: #{nnet_forward.1} parent=27 // pred_region
              // Predicated region
              $region44: #{nnet_forward.1} parent=31 // pred_check
                _
              $region45: #{nnet_forward.1} parent=31 // pred_check_branch
                %152 = sbr.rel (0) target = $region47
              $region46: #{nnet_forward.1} parent=31 // pred_region
                loop: start=0, step=1, limit=1
                $region48: #{nnet_forward.1} parent=46 // loop_pre_header
                  _
                $region49: #{nnet_forward.1} parent=46 // loop_header
                  %s154 = sphi 0, %s158
                  %p155 = scmp.ge.s32.totalorder %s154, 1
                  %s159 = sphi %s123, %s123
                  %s160 = sphi %s121, %s121
                $region50: #{nnet_forward.1} parent=46 // loop_header_branch
                  %157 = sbr.rel (%p155) target = $region54
                $region51: #{nnet_forward.1} parent=46 // loop_body
                  %v161 = vld [vmem:[%s159] sm:$0xff]
                  %162 = vst [vmem:[%s160] sm:$0xff] %v161
                  %v163 = vld [vmem:[%s159 + $0x10] sm:$0xff]
                  %164 = vst [vmem:[%s160 + $0x8] sm:$0xff] %v163
                  %v165 = vld [vmem:[%s159 + $0x20] sm:$0xff]
                  %166 = vst [vmem:[%s160 + $0x10] sm:$0xff] %v165
                  %v167 = vld [vmem:[%s159 + $0x30] sm:$0xff]
                  %168 = vst [vmem:[%s160 + $0x18] sm:$0xff] %v167
                  %v169 = vld [vmem:[%s159 + $0x40] sm:$0xff]
                  %170 = vst [vmem:[%s160 + $0x20] sm:$0xff] %v169
                  %v171 = vld [vmem:[%s159 + $0x50] sm:$0xff]
                  %172 = vst [vmem:[%s160 + $0x28] sm:$0xff] %v171
                $region52: #{nnet_forward.1} parent=46 // loop_footer
                  %s158 = sadd.s32 1, %s154
                $region53: #{nnet_forward.1} parent=46 // loop_footer_branch
                  %153 = sbr.rel target = $region49
                $region54: #{nnet_forward.1} parent=46 // loop_exit
                  _
              $region47: #{nnet_forward.1} parent=31 // pred_fallthru
                _
              // Predicated region
              $region55: #{nnet_forward.1} parent=31 // pred_check
                _
              $region56: #{nnet_forward.1} parent=31 // pred_check_branch
                %174 = sbr.rel target = $region58
              $region57: #{nnet_forward.1} parent=31 // pred_region
                _
              $region58: #{nnet_forward.1} parent=31 // pred_fallthru
                _
            $region32: #{nnet_forward.1} parent=27 // pred_fallthru
              _
            // Predicated region
            $region33: #{nnet_forward.1} parent=27 // pred_check
              _
            $region34: #{nnet_forward.1} parent=27 // pred_check_branch
              %129 = sbr.rel target = $region36
            $region35: #{nnet_forward.1} parent=27 // pred_region
              loop: start=0, step=1, limit=1
              $region37: #{nnet_forward.1} parent=35 // loop_pre_header
                _
              $region38: #{nnet_forward.1} parent=35 // loop_header
                %s132 = sphi 0, %s136
                %p133 = scmp.ge.s32.totalorder %s132, 1
                %s137 = sphi %s123, %s123
                %s138 = sphi %s121, %s121
              $region39: #{nnet_forward.1} parent=35 // loop_header_branch
                %135 = sbr.rel (%p133) target = $region43
              $region40: #{nnet_forward.1} parent=35 // loop_body
                %v139 = vld [vmem:[%s137] sm:$0xff]
                %140 = vst [vmem:[%s138] sm:$0xff] %v139
                %v141 = vld [vmem:[%s137 + $0x10] sm:$0xff]
                %142 = vst [vmem:[%s138 + $0x8] sm:$0xff] %v141
                %v143 = vld [vmem:[%s137 + $0x20] sm:$0xff]
                %144 = vst [vmem:[%s138 + $0x10] sm:$0xff] %v143
                %v145 = vld [vmem:[%s137 + $0x30] sm:$0xff]
                %146 = vst [vmem:[%s138 + $0x18] sm:$0xff] %v145
                %v147 = vld [vmem:[%s137 + $0x40] sm:$0xff]
                %148 = vst [vmem:[%s138 + $0x20] sm:$0xff] %v147
                %v149 = vld [vmem:[%s137 + $0x50] sm:$0xff]
                %150 = vst [vmem:[%s138 + $0x28] sm:$0xff] %v149
              $region41: #{nnet_forward.1} parent=35 // loop_footer
                %s136 = sadd.s32 1, %s132
              $region42: #{nnet_forward.1} parent=35 // loop_footer_branch
                %131 = sbr.rel target = $region38
              $region43: #{nnet_forward.1} parent=35 // loop_exit
                _
            $region36: #{nnet_forward.1} parent=27 // pred_fallthru
              _
          $region28: #{nnet_forward.1} parent=23 // pred_fallthru
            _
          %175 = vnop
        $region24: #{nnet_forward.1} parent=19 // pred_fallthru
          _
      $region20: #{nnet_forward.1} parent=5 // pred_fallthru
        _
      %p176 = scmp.le.s32.totalorder 1, %s12
      %p177 = scmp.lt.s32.totalorder %s12, 3
      %p178 = pnand %p176, %p177
      %p179 = pneg %p178
      // Predicated region
      $region59: #{nnet_forward.1} parent=5 // pred_check
        _
      $region60: #{nnet_forward.1} parent=5 // pred_check_branch
        %181 = sbr.rel (%p178) target = $region62
      $region61: #{nnet_forward.1} parent=5 // pred_region
        %s182 = ssub.s32 %s12, 1
        // Predicated region
        $region63: #{nnet_forward.1} parent=61 // pred_check
          %p183 = pneg %p33
        $region64: #{nnet_forward.1} parent=61 // pred_check_branch
          %185 = sbr.rel (%p183) target = $region66
        $region65: #{nnet_forward.1} parent=61 // pred_region
          %186 = dma.done [#allocation4], 16
        $region66: #{nnet_forward.1} parent=61 // pred_fallthru
          _
        %s187 = sand.u32 %s46, 1
        %s188 = sand.u32 %s46, 1
        %s189 = smul.addr %s188, 48
        %s190 = scalar_lea.vmem [#allocation5], %s189
        // Predicated region
        $region67: #{nnet_forward.1} parent=61 // pred_check
          %p191 = pneg %p59
        $region68: #{nnet_forward.1} parent=61 // pred_check_branch
          %193 = sbr.rel (%p191) target = $region70
        $region69: #{nnet_forward.1} parent=61 // pred_region
          _
        $region70: #{nnet_forward.1} parent=61 // pred_fallthru
          _
        %194 = sfence
        %p195 = pneg %p33
        %p196 = pneg %p30
        %s197 = sand.u32 %s46, 1
        %s198 = sand.u32 %s46, 1
        %s199 = smul.addr %s198, 48
        %s200 = scalar_lea.vmem [#allocation5], %s199
        %p201 = pneg %p59
        %p202 = pneg %p56
        %p203 = pneg %p85
        %p204 = pneg %p82
        %s205 = sand.u32 %s72, 1
        %s206 = scalar_lea.sflag [#allocation3], %s205
        %s207 = sand.u32 %s72, 1
        %s208 = smul.addr %s207, 8
        %s209 = scalar_lea.vmem [#allocation6], %s208
        %s210 = sld [smem:[#allocation2]]
        %v211 = vld [vmem:[%s190] sm:$0xff]
        %v212 = vstv %s210
        %v213 = vmul.f32 %v212, %v211
        %s214 = sld [smem:[#allocation2 + $0x1]]
        %s215 = scalar_lea.vmem %s190, 8 [#allocation5]
        %v216 = vld [vmem:[%s215] sm:$0xff]
        %v217 = vstv %s214
        %v218 = vmul.f32 %v217, %v216
        %v219 = vadd.f32 %v213, %v218
        %s220 = sld [smem:[#allocation2 + $0x2]]
        %s221 = scalar_lea.vmem %s190, 16 [#allocation5]
        %v222 = vld [vmem:[%s221] sm:$0xff]
        %v223 = vstv %s220
        %v224 = vmul.f32 %v223, %v222
        %v225 = vadd.f32 %v219, %v224
        %s226 = sld [smem:[#allocation2 + $0x3]]
        %s227 = scalar_lea.vmem %s190, 24 [#allocation5]
        %v228 = vld [vmem:[%s227] sm:$0xff]
        %v229 = vstv %s226
        %v230 = vmul.f32 %v229, %v228
        %v231 = vadd.f32 %v225, %v230
        %s232 = sld [smem:[#allocation2 + $0x4]]
        %s233 = scalar_lea.vmem %s190, 32 [#allocation5]
        %v234 = vld [vmem:[%s233] sm:$0xff]
        %v235 = vstv %s232
        %v236 = vmul.f32 %v235, %v234
        %v237 = vadd.f32 %v231, %v236
        %s238 = sld [smem:[#allocation2 + $0x5]]
        %s239 = scalar_lea.vmem %s190, 40 [#allocation5]
        %v240 = vld [vmem:[%s239] sm:$0xff]
        %v241 = vstv %s238
        %v242 = vmul.f32 %v241, %v240
        %v243 = vadd.f32 %v237, %v242
        %s244 = sld [smem:[#allocation2 + $0x12]]
        %v245 = vstv %s244
        %v246 = vadd.f32 %v243, %v245
        %vm247 = vcmp.ge.f32.partialorder %v246, 0.0
        %v248 = vmul.f32 %v246, 0.01
        %v249 = vsel %vm247, %v246, %v248
        %s250 = sld [smem:[#allocation2 + $0x6]]
        %v251 = vstv %s250
        %v252 = vmul.f32 %v251, %v211
        %s253 = sld [smem:[#allocation2 + $0x7]]
        %v254 = vstv %s253
        %v255 = vmul.f32 %v254, %v216
        %v256 = vadd.f32 %v252, %v255
        %s257 = sld [smem:[#allocation2 + $0x8]]
        %v258 = vstv %s257
        %v259 = vmul.f32 %v258, %v222
        %v260 = vadd.f32 %v256, %v259
        %s261 = sld [smem:[#allocation2 + $0x9]]
        %v262 = vstv %s261
        %v263 = vmul.f32 %v262, %v228
        %v264 = vadd.f32 %v260, %v263
        %s265 = sld [smem:[#allocation2 + $0xa]]
        %v266 = vstv %s265
        %v267 = vmul.f32 %v266, %v234
        %v268 = vadd.f32 %v264, %v267
        %s269 = sld [smem:[#allocation2 + $0xb]]
        %v270 = vstv %s269
        %v271 = vmul.f32 %v270, %v240
        %v272 = vadd.f32 %v268, %v271
        %s273 = sld [smem:[#allocation2 + $0x13]]
        %v274 = vstv %s273
        %v275 = vadd.f32 %v272, %v274
        %vm276 = vcmp.ge.f32.partialorder %v275, 0.0
        %v277 = vmul.f32 %v275, 0.01
        %v278 = vsel %vm276, %v275, %v277
        %s279 = sld [smem:[#allocation2 + $0xc]]
        %v280 = vstv %s279
        %v281 = vmul.f32 %v280, %v211
        %s282 = sld [smem:[#allocation2 + $0xd]]
        %v283 = vstv %s282
        %v284 = vmul.f32 %v283, %v216
        %v285 = vadd.f32 %v281, %v284
        %s286 = sld [smem:[#allocation2 + $0xe]]
        %v287 = vstv %s286
        %v288 = vmul.f32 %v287, %v222
        %v289 = vadd.f32 %v285, %v288
        %s290 = sld [smem:[#allocation2 + $0xf]]
        %v291 = vstv %s290
        %v292 = vmul.f32 %v291, %v228
        %v293 = vadd.f32 %v289, %v292
        %s294 = sld [smem:[#allocation2 + $0x10]]
        %v295 = vstv %s294
        %v296 = vmul.f32 %v295, %v234
        %v297 = vadd.f32 %v293, %v296
        %s298 = sld [smem:[#allocation2 + $0x11]]
        %v299 = vstv %s298
        %v300 = vmul.f32 %v299, %v240
        %v301 = vadd.f32 %v297, %v300
        %s302 = sld [smem:[#allocation2 + $0x14]]
        %v303 = vstv %s302
        %v304 = vadd.f32 %v301, %v303
        %vm305 = vcmp.ge.f32.partialorder %v304, 0.0
        %v306 = vmul.f32 %v304, 0.01
        %v307 = vsel %vm305, %v304, %v306
        %s308 = sld [smem:[#allocation2 + $0x15]]
        %v309 = vstv %s308
        %v310 = vmul.f32 %v309, %v249
        %s311 = sld [smem:[#allocation2 + $0x16]]
        %v312 = vstv %s311
        %v313 = vmul.f32 %v312, %v278
        %v314 = vadd.f32 %v310, %v313
        %s315 = sld [smem:[#allocation2 + $0x17]]
        %v316 = vstv %s315
        %v317 = vmul.f32 %v316, %v307
        %v318 = vadd.f32 %v314, %v317
        %s319 = sld [smem:[#allocation2 + $0x1b]]
        %v320 = vstv %s319
        %v321 = vadd.f32 %v318, %v320
        %vm322 = vcmp.ge.f32.partialorder %v321, 0.0
        %v323 = vmul.f32 %v321, 0.01
        %v324 = vsel %vm322, %v321, %v323
        %s325 = sld [smem:[#allocation2 + $0x18]]
        %v326 = vstv %s325
        %v327 = vmul.f32 %v326, %v249
        %s328 = sld [smem:[#allocation2 + $0x19]]
        %v329 = vstv %s328
        %v330 = vmul.f32 %v329, %v278
        %v331 = vadd.f32 %v327, %v330
        %s332 = sld [smem:[#allocation2 + $0x1a]]
        %v333 = vstv %s332
        %v334 = vmul.f32 %v333, %v307
        %v335 = vadd.f32 %v331, %v334
        %s336 = sld [smem:[#allocation2 + $0x1c]]
        %v337 = vstv %s336
        %v338 = vadd.f32 %v335, %v337
        %vm339 = vcmp.ge.f32.partialorder %v338, 0.0
        %v340 = vmul.f32 %v338, 0.01
        %v341 = vsel %vm339, %v338, %v340
        %s342 = sld [smem:[#allocation2 + $0x1d]]
        %v343 = vstv %s342
        %v344 = vmul.f32 %v343, %v324
        %s345 = sld [smem:[#allocation2 + $0x1e]]
        %v346 = vstv %s345
        %v347 = vmul.f32 %v346, %v341
        %v348 = vadd.f32 %v344, %v347
        %s349 = sld [smem:[#allocation2 + $0x1f]]
        %v350 = vstv %s349
        %v351 = vadd.f32 %v348, %v350
        %352 = vst [vmem:[%s209] sm:$0xff] %v351
        %s353 = sand.u32 %s72, 1
        %s354 = scalar_lea.sflag [#allocation3], %s353
        %s355 = sand.u32 %s72, 1
        %s356 = smul.addr %s355, 8
        %s357 = scalar_lea.vmem [#allocation6], %s356
        // Predicated region
        $region71: #{nnet_forward.1} parent=61 // pred_check
          %p358 = pneg %p82
        $region72: #{nnet_forward.1} parent=61 // pred_check_branch
          %360 = sbr.rel (%p358) target = $region74
        $region73: #{nnet_forward.1} parent=61 // pred_region
          %s362 = ssub.s32 128, 128
          %363 = vsyncadd %s354, %s362
          %s364 = smul.addr %s17, 128
          %s365 = scalar_lea.hbm %s2, %s364
          %s367 = sshll.u32 %s357, 4
          %s368 = int_to_ptr.vmem [resolvable:$true] %s367
          %370 = dma.vmem_to_hbm [thread:$0]  %s368, 128, %s365, %s354
        $region74: #{nnet_forward.1} parent=61 // pred_fallthru
          _
      $region62: #{nnet_forward.1} parent=5 // pred_fallthru
        _
      %p371 = scmp.le.s32.totalorder 2, %s12
      // Predicated region
      $region75: #{nnet_forward.1} parent=5 // pred_check
        %p372 = pneg %p371
      $region76: #{nnet_forward.1} parent=5 // pred_check_branch
        %374 = sbr.rel (%p372) target = $region78
      $region77: #{nnet_forward.1} parent=5 // pred_region
        %s375 = ssub.s32 %s12, 2
        // Predicated region
        $region79: #{nnet_forward.1} parent=77 // pred_check
          %p376 = pneg %p88
        $region80: #{nnet_forward.1} parent=77 // pred_check_branch
          %378 = sbr.rel (%p376) target = $region82
        $region81: #{nnet_forward.1} parent=77 // pred_region
          %s379 = sand.u32 %s73, 1
          %s380 = scalar_lea.sflag [#allocation3], %s379
          %s381 = sand.u32 %s73, 1
          %s382 = smul.addr %s381, 8
          %s383 = scalar_lea.vmem [#allocation6], %s382
          %384 = dma.done %s380, 128
        $region82: #{nnet_forward.1} parent=77 // pred_fallthru
          _
      $region78: #{nnet_forward.1} parent=5 // pred_fallthru
        _
    $region6: #{nnet_forward.1} parent=1 // loop_footer
      %s16 = sadd.s32 1, %s12
    $region7: #{nnet_forward.1} parent=1 // loop_footer_branch
      %11 = sbr.rel target = $region3
    $region8: #{nnet_forward.1} parent=1 // loop_exit
      _
    %385 = vsyncpa [#allocation3], 1
    %s386 = scalar_lea.sflag [#allocation3], 1
    %387 = vsyncpa %s386, 1
    %388 = vsyncpa [#allocation4], 1
    %s389 = scalar_lea.sflag [#allocation4], 1
    %390 = vsyncpa %s389, 1

</llo_original>
